<compile_context>
chip_gen: v5e
topology: v5e:2x2
jax: 0.10.0
libtpu: 0.0.40
codegen_flags: <defaults>
</compile_context>

<pallas_src>
import numpy as np

import jax
import jax.numpy as jnp
from jax import lax
from jax.experimental import pallas as pl
from jax.experimental.pallas import tpu as pltpu

N_EMBED = 32
BLOCK_SIZE = 8
N_HEADS = 4
HEAD_SIZE = N_EMBED // N_HEADS
VOCAB_SIZE = 65          # synthetic vocab (len(set(text)) in the original script)
VOCAB_PAD = 128          # lane-dense padded vocab (lm-head output / token-emb rows)
FF_HIDDEN = 4 * N_EMBED  # 128


def model_kernel(idx_ref, tok_ref, pos_ref, bias_ref, wqkv_ref,
                 wa_ref, ba_ref, wb_ref, bb_ref, out_ref):
    """Whole forward in one kernel invocation; everything resident in VMEM."""
    m = idx_ref.shape[0]                                   # M = B*T (static)

    # --- embeddings: one-hot(index) @ tok_emb on the MXU + position add ------------
    idx = idx_ref[...]                                     # (M, 1) int32
    onehot = (idx == lax.broadcasted_iota(jnp.int32, (m, VOCAB_PAD), 1)
              ).astype(jnp.float32)                        # (M, 128)
    x = jnp.dot(onehot, tok_ref[...],
                preferred_element_type=jnp.float32) + pos_ref[...]        # (M, E)

    # --- fused q/k/v projection: one (M,E) @ (E,3E) matmul -------------------------
    qkv = jnp.dot(x, wqkv_ref[...], preferred_element_type=jnp.float32)   # (M, 3E)

    bias = bias_ref[...]                                   # (M, M) additive causal mask
    scale = float(N_EMBED) ** -0.5                         # PyTorch Head scales by C**-0.5

    head_outs = []
    for h in range(N_HEADS):                               # static unroll, 4 heads
        q_h = qkv[:, h * HEAD_SIZE:(h + 1) * HEAD_SIZE]
        k_h = qkv[:, N_EMBED + h * HEAD_SIZE:N_EMBED + (h + 1) * HEAD_SIZE]
        v_h = qkv[:, 2 * N_EMBED + h * HEAD_SIZE:2 * N_EMBED + (h + 1) * HEAD_SIZE]
        # contract dim 1 of both operands: q @ k^T without an explicit transpose
        att = lax.dot_general(q_h, k_h, (((1,), (1,)), ((), ())),
                              preferred_element_type=jnp.float32) * scale + bias
        att = att - jnp.max(att, axis=-1, keepdims=True)
        p = jnp.exp(att)
        p = p / jnp.sum(p, axis=-1, keepdims=True)         # exact divide (parity)
        head_outs.append(jnp.dot(p, v_h, preferred_element_type=jnp.float32))
    heads = jnp.concatenate(head_outs, axis=1)             # (M, E): lane placement only

    # --- fused (attn out-proj + FF layer 1) -> ReLU ---------------------------------
    h1 = jnp.maximum(
        jnp.dot(heads, wa_ref[...], preferred_element_type=jnp.float32) + ba_ref[...],
        0.0)                                               # (M, 128)

    # --- fused (FF layer 2 + lm head); lane-dense (M, 128) store --------------------
    out_ref[...] = (jnp.dot(h1, wb_ref[...], preferred_element_type=jnp.float32)
                    + bb_ref[...])


def prepare_params(params, batch_size, seq_len):
    """One-time weight/mask preparation, hoisted out of the per-call hot path."""
    m = batch_size * seq_len
    # fused q/k/v weights
    wqkv = jnp.concatenate([params["wq"], params["wk"], params["wv"]], axis=1)  # (E,3E)
    # attn out-proj folded into FF layer 1
    wa = params["wo"] @ params["w1"]                            # (E, 4E)
    ba = params["bo"] @ params["w1"] + params["b1"]             # (1, 4E)
    # FF layer 2 folded into (lane-padded) lm head
    wl_pad = jnp.pad(params["wl"], ((0, 0), (0, VOCAB_PAD - VOCAB_SIZE)))
    bl_pad = jnp.pad(params["bl"], ((0, 0), (0, VOCAB_PAD - VOCAB_SIZE)))
    wb = params["w2"] @ wl_pad                                  # (4E, 128)
    bb = params["b2"] @ wl_pad + bl_pad                         # (1, 128)
    # token embedding padded to 128 rows for the in-kernel one-hot gather
    tok_pad = jnp.pad(params["tok_emb"], ((0, VOCAB_PAD - VOCAB_SIZE), (0, 0)))
    # position embedding pre-tiled over the flattened batch
    pos_full = jnp.tile(params["pos_emb"][:seq_len], (batch_size, 1))   # (M, E)
    # block-diagonal (same-sequence) causal additive bias over flattened rows,
    # built with numpy at prepare time (no in-kernel iota / int-div / selects)
    r = np.arange(m)
    allowed = ((r[:, None] // seq_len == r[None, :] // seq_len)
               & (r[None, :] <= r[:, None]))
    bias = jnp.asarray(np.where(allowed, 0.0, -1e30), dtype=jnp.float32)  # (M, M)
    return {"wqkv": wqkv, "wa": wa, "ba": ba, "wb": wb, "bb": bb,
            "tok_pad": tok_pad, "pos_full": pos_full, "bias": bias}


def bigram_forward(index, prep):
    """targets=None path of the PyTorch module -> returns logits (loss is None)."""
    batch_size, seq_len = index.shape
    m = batch_size * seq_len
    idx2 = index.reshape(m, 1).astype(jnp.int32)

    args = (idx2, prep["tok_pad"], prep["pos_full"], prep["bias"],
            prep["wqkv"], prep["wa"], prep["ba"], prep["wb"], prep["bb"])
    vmem = pl.BlockSpec(memory_space=pltpu.MemorySpace.VMEM)

    logits_pad = pl.pallas_call(
        model_kernel,
        out_shape=jax.ShapeDtypeStruct((m, VOCAB_PAD), jnp.float32),
        in_specs=[vmem] * len(args),
        out_specs=vmem,
    )(*args)

    # slice the padded vocab back to 65 and restore (B, T, vocab)
    return logits_pad[:, :VOCAB_SIZE].reshape(batch_size, seq_len, VOCAB_SIZE)


def bigram_forward_ref(index, params):
    """Pure-JAX reference with identical semantics (for the correctness check)."""
    tok = params["tok_emb"][index]
    pos = params["pos_emb"][: index.shape[1]]
    x = tok + pos
    q = x @ params["wq"]
    k = x @ params["wk"]
    v = x @ params["wv"]
    seq_len = x.shape[1]
    mask = jnp.tril(jnp.ones((seq_len, seq_len), dtype=bool))
    scale = float(N_EMBED) ** -0.5
    outs = []
    for h in range(N_HEADS):
        s = slice(h * HEAD_SIZE, (h + 1) * HEAD_SIZE)
        att = jnp.einsum("btd,bsd->bts", q[..., s], k[..., s]) * scale
        att = jnp.where(mask, att, -jnp.inf)
        att = jax.nn.softmax(att, axis=-1)
        outs.append(jnp.einsum("bts,bsd->btd", att, v[..., s]))
    a = jnp.concatenate(outs, -1) @ params["wo"] + params["bo"][0]
    h1 = jax.nn.relu(a @ params["w1"] + params["b1"][0])
    ff = h1 @ params["w2"] + params["b2"][0]
    return ff @ params["wl"] + params["bl"][0]


def init_params(key):
    ks = jax.random.split(key, 12)
    n = lambda k, shape, s=0.02: (s * jax.random.normal(k, shape)).astype(jnp.float32)
    return {
        "tok_emb": n(ks[0], (VOCAB_SIZE, N_EMBED)),
        "pos_emb": n(ks[1], (BLOCK_SIZE, N_EMBED)),
        # per-head q/k/v weights concatenated along the output axis (no bias)
        "wq": n(ks[2], (N_EMBED, N_EMBED)),
        "wk": n(ks[3], (N_EMBED, N_EMBED)),
        "wv": n(ks[4], (N_EMBED, N_EMBED)),
        "wo": n(ks[5], (N_EMBED, N_EMBED)),
        "bo": n(ks[6], (1, N_EMBED)),
        "w1": n(ks[7], (N_EMBED, FF_HIDDEN)),
        "b1": n(ks[8], (1, FF_HIDDEN)),
        "w2": n(ks[9], (FF_HIDDEN, N_EMBED)),
        "b2": n(ks[10], (1, N_EMBED)),
        "wl": n(ks[11], (N_EMBED, VOCAB_SIZE)),
        "bl": jnp.zeros((1, VOCAB_SIZE), jnp.float32),
    }


if __name__ == "__main__":
    key = jax.random.PRNGKey(0)
    pkey, ikey = jax.random.split(key)
    params = init_params(pkey)

    B, T = 2, BLOCK_SIZE
    index = jax.random.randint(ikey, (B, T), 0, VOCAB_SIZE, dtype=jnp.int32)

    prep = prepare_params(params, B, T)            # one-time weight/mask prep
    logits = jax.block_until_ready(bigram_forward(index, prep))
    ref = jax.block_until_ready(bigram_forward_ref(index, params))

    assert logits.shape == (B, T, VOCAB_SIZE), logits.shape
    # prefused weights reassociate the f32 accumulation (~ulp level) -> small tolerance
    assert jnp.allclose(logits, ref, atol=1e-4, rtol=1e-4), "mismatch vs reference"
    # targets=None path -> loss is None; generate() (sampling loop) is host-side glue.
    print("KERNEL_OK")
</pallas_src>

<mosaic_0001>
module attributes {stable_mosaic.version = 11 : i64} {
  func.func @model_kernel(%arg0: memref<16x1xi32, #tpu.memory_space<vmem>>, %arg1: memref<128x32xf32, #tpu.memory_space<vmem>>, %arg2: memref<16x32xf32, #tpu.memory_space<vmem>>, %arg3: memref<16x16xf32, #tpu.memory_space<vmem>>, %arg4: memref<32x96xf32, #tpu.memory_space<vmem>>, %arg5: memref<32x128xf32, #tpu.memory_space<vmem>>, %arg6: memref<1x128xf32, #tpu.memory_space<vmem>>, %arg7: memref<128x128xf32, #tpu.memory_space<vmem>>, %arg8: memref<1x128xf32, #tpu.memory_space<vmem>>, %arg9: memref<16x128xf32, #tpu.memory_space<vmem>>) attributes {dimension_semantics = [], scalar_prefetch = 0 : i64, scratch_operands = 0 : i64, tpu.core_type = #tpu.core_type<tc>} {
    %c0 = arith.constant 0 : index
    %c0_0 = arith.constant 0 : index
    %0 = vector.load %arg0[%c0, %c0_0] : memref<16x1xi32, #tpu.memory_space<vmem>>, vector<16x1xi32>
    %1 = tpu.iota {dimensions = array<i32: 1>} : vector<16x128xi32>
    %2 = vector.broadcast %0 : vector<16x1xi32> to vector<16x128xi32>
    %3 = arith.cmpi eq, %2, %1 : vector<16x128xi32>
    %4 = arith.extui %3 : vector<16x128xi1> to vector<16x128xi32>
    %5 = arith.sitofp %4 : vector<16x128xi32> to vector<16x128xf32>
    %c0_1 = arith.constant 0 : index
    %c0_2 = arith.constant 0 : index
    %6 = vector.load %arg1[%c0_1, %c0_2] : memref<128x32xf32, #tpu.memory_space<vmem>>, vector<128x32xf32>
    %cst = arith.constant dense<0.000000e+00> : vector<16x32xf32>
    %7 = tpu.matmul %5, %6, %cst {dimension_numbers = #tpu.dot_dimension_numbers<[1], [0], [0], [1], [0, 0, 1, 1], [], []>} : vector<16x128xf32>, vector<128x32xf32>, vector<16x32xf32> -> vector<16x32xf32>
    %c0_3 = arith.constant 0 : index
    %c0_4 = arith.constant 0 : index
    %8 = vector.load %arg2[%c0_3, %c0_4] : memref<16x32xf32, #tpu.memory_space<vmem>>, vector<16x32xf32>
    %9 = arith.addf %7, %8 : vector<16x32xf32>
    %c0_5 = arith.constant 0 : index
    %c0_6 = arith.constant 0 : index
    %10 = vector.load %arg4[%c0_5, %c0_6] : memref<32x96xf32, #tpu.memory_space<vmem>>, vector<32x96xf32>
    %cst_7 = arith.constant dense<0.000000e+00> : vector<16x96xf32>
    %11 = tpu.matmul %9, %10, %cst_7 {dimension_numbers = #tpu.dot_dimension_numbers<[1], [0], [0], [1], [0, 0, 1, 1], [], []>} : vector<16x32xf32>, vector<32x96xf32>, vector<16x96xf32> -> vector<16x96xf32>
    %c0_8 = arith.constant 0 : index
    %c0_9 = arith.constant 0 : index
    %12 = vector.load %arg3[%c0_8, %c0_9] : memref<16x16xf32, #tpu.memory_space<vmem>>, vector<16x16xf32>
    %13 = vector.extract_strided_slice %11 {offsets = [0, 0], sizes = [16, 8], strides = [1, 1]} : vector<16x96xf32> to vector<16x8xf32>
    %14 = vector.extract_strided_slice %11 {offsets = [0, 32], sizes = [16, 8], strides = [1, 1]} : vector<16x96xf32> to vector<16x8xf32>
    %15 = vector.extract_strided_slice %11 {offsets = [0, 64], sizes = [16, 8], strides = [1, 1]} : vector<16x96xf32> to vector<16x8xf32>
    %cst_10 = arith.constant dense<0.000000e+00> : vector<16x16xf32>
    %16 = tpu.matmul %13, %14, %cst_10 {dimension_numbers = #tpu.dot_dimension_numbers<[1], [1], [0], [0], [0, 0, 1, 0], [], []>} : vector<16x8xf32>, vector<16x8xf32>, vector<16x16xf32> -> vector<16x16xf32>
    %cst_11 = arith.constant 0.176776692 : f32
    %17 = vector.broadcast %cst_11 : f32 to vector<16x16xf32>
    %18 = arith.mulf %16, %17 : vector<16x16xf32>
    %19 = arith.addf %18, %12 : vector<16x16xf32>
    %cst_12 = arith.constant dense<0xFF800000> : vector<16xf32>
    %20 = vector.multi_reduction <maximumf>, %19, %cst_12 [1] : vector<16x16xf32> to vector<16xf32>
    %21 = vector.shape_cast %20 : vector<16xf32> to vector<16x1xf32>
    %22 = vector.broadcast %21 : vector<16x1xf32> to vector<16x16xf32>
    %23 = arith.subf %19, %22 : vector<16x16xf32>
    %24 = math.exp %23 : vector<16x16xf32>
    %cst_13 = arith.constant dense<0.000000e+00> : vector<16xf32>
    %25 = vector.multi_reduction <add>, %24, %cst_13 [1] : vector<16x16xf32> to vector<16xf32>
    %26 = vector.shape_cast %25 : vector<16xf32> to vector<16x1xf32>
    %27 = vector.broadcast %26 : vector<16x1xf32> to vector<16x16xf32>
    %28 = arith.divf %24, %27 : vector<16x16xf32>
    %cst_14 = arith.constant dense<0.000000e+00> : vector<16x8xf32>
    %29 = tpu.matmul %28, %15, %cst_14 {dimension_numbers = #tpu.dot_dimension_numbers<[1], [0], [0], [1], [0, 0, 1, 1], [], []>} : vector<16x16xf32>, vector<16x8xf32>, vector<16x8xf32> -> vector<16x8xf32>
    %30 = vector.extract_strided_slice %11 {offsets = [0, 8], sizes = [16, 8], strides = [1, 1]} : vector<16x96xf32> to vector<16x8xf32>
    %31 = vector.extract_strided_slice %11 {offsets = [0, 40], sizes = [16, 8], strides = [1, 1]} : vector<16x96xf32> to vector<16x8xf32>
    %32 = vector.extract_strided_slice %11 {offsets = [0, 72], sizes = [16, 8], strides = [1, 1]} : vector<16x96xf32> to vector<16x8xf32>
    %cst_15 = arith.constant dense<0.000000e+00> : vector<16x16xf32>
    %33 = tpu.matmul %30, %31, %cst_15 {dimension_numbers = #tpu.dot_dimension_numbers<[1], [1], [0], [0], [0, 0, 1, 0], [], []>} : vector<16x8xf32>, vector<16x8xf32>, vector<16x16xf32> -> vector<16x16xf32>
    %cst_16 = arith.constant 0.176776692 : f32
    %34 = vector.broadcast %cst_16 : f32 to vector<16x16xf32>
    %35 = arith.mulf %33, %34 : vector<16x16xf32>
    %36 = arith.addf %35, %12 : vector<16x16xf32>
    %cst_17 = arith.constant dense<0xFF800000> : vector<16xf32>
    %37 = vector.multi_reduction <maximumf>, %36, %cst_17 [1] : vector<16x16xf32> to vector<16xf32>
    %38 = vector.shape_cast %37 : vector<16xf32> to vector<16x1xf32>
    %39 = vector.broadcast %38 : vector<16x1xf32> to vector<16x16xf32>
    %40 = arith.subf %36, %39 : vector<16x16xf32>
    %41 = math.exp %40 : vector<16x16xf32>
    %cst_18 = arith.constant dense<0.000000e+00> : vector<16xf32>
    %42 = vector.multi_reduction <add>, %41, %cst_18 [1] : vector<16x16xf32> to vector<16xf32>
    %43 = vector.shape_cast %42 : vector<16xf32> to vector<16x1xf32>
    %44 = vector.broadcast %43 : vector<16x1xf32> to vector<16x16xf32>
    %45 = arith.divf %41, %44 : vector<16x16xf32>
    %cst_19 = arith.constant dense<0.000000e+00> : vector<16x8xf32>
    %46 = tpu.matmul %45, %32, %cst_19 {dimension_numbers = #tpu.dot_dimension_numbers<[1], [0], [0], [1], [0, 0, 1, 1], [], []>} : vector<16x16xf32>, vector<16x8xf32>, vector<16x8xf32> -> vector<16x8xf32>
    %47 = vector.extract_strided_slice %11 {offsets = [0, 16], sizes = [16, 8], strides = [1, 1]} : vector<16x96xf32> to vector<16x8xf32>
    %48 = vector.extract_strided_slice %11 {offsets = [0, 48], sizes = [16, 8], strides = [1, 1]} : vector<16x96xf32> to vector<16x8xf32>
    %49 = vector.extract_strided_slice %11 {offsets = [0, 80], sizes = [16, 8], strides = [1, 1]} : vector<16x96xf32> to vector<16x8xf32>
    %cst_20 = arith.constant dense<0.000000e+00> : vector<16x16xf32>
    %50 = tpu.matmul %47, %48, %cst_20 {dimension_numbers = #tpu.dot_dimension_numbers<[1], [1], [0], [0], [0, 0, 1, 0], [], []>} : vector<16x8xf32>, vector<16x8xf32>, vector<16x16xf32> -> vector<16x16xf32>
    %cst_21 = arith.constant 0.176776692 : f32
    %51 = vector.broadcast %cst_21 : f32 to vector<16x16xf32>
    %52 = arith.mulf %50, %51 : vector<16x16xf32>
    %53 = arith.addf %52, %12 : vector<16x16xf32>
    %cst_22 = arith.constant dense<0xFF800000> : vector<16xf32>
    %54 = vector.multi_reduction <maximumf>, %53, %cst_22 [1] : vector<16x16xf32> to vector<16xf32>
    %55 = vector.shape_cast %54 : vector<16xf32> to vector<16x1xf32>
    %56 = vector.broadcast %55 : vector<16x1xf32> to vector<16x16xf32>
    %57 = arith.subf %53, %56 : vector<16x16xf32>
    %58 = math.exp %57 : vector<16x16xf32>
    %cst_23 = arith.constant dense<0.000000e+00> : vector<16xf32>
    %59 = vector.multi_reduction <add>, %58, %cst_23 [1] : vector<16x16xf32> to vector<16xf32>
    %60 = vector.shape_cast %59 : vector<16xf32> to vector<16x1xf32>
    %61 = vector.broadcast %60 : vector<16x1xf32> to vector<16x16xf32>
    %62 = arith.divf %58, %61 : vector<16x16xf32>
    %cst_24 = arith.constant dense<0.000000e+00> : vector<16x8xf32>
    %63 = tpu.matmul %62, %49, %cst_24 {dimension_numbers = #tpu.dot_dimension_numbers<[1], [0], [0], [1], [0, 0, 1, 1], [], []>} : vector<16x16xf32>, vector<16x8xf32>, vector<16x8xf32> -> vector<16x8xf32>
    %64 = vector.extract_strided_slice %11 {offsets = [0, 24], sizes = [16, 8], strides = [1, 1]} : vector<16x96xf32> to vector<16x8xf32>
    %65 = vector.extract_strided_slice %11 {offsets = [0, 56], sizes = [16, 8], strides = [1, 1]} : vector<16x96xf32> to vector<16x8xf32>
    %66 = vector.extract_strided_slice %11 {offsets = [0, 88], sizes = [16, 8], strides = [1, 1]} : vector<16x96xf32> to vector<16x8xf32>
    %cst_25 = arith.constant dense<0.000000e+00> : vector<16x16xf32>
    %67 = tpu.matmul %64, %65, %cst_25 {dimension_numbers = #tpu.dot_dimension_numbers<[1], [1], [0], [0], [0, 0, 1, 0], [], []>} : vector<16x8xf32>, vector<16x8xf32>, vector<16x16xf32> -> vector<16x16xf32>
    %cst_26 = arith.constant 0.176776692 : f32
    %68 = vector.broadcast %cst_26 : f32 to vector<16x16xf32>
    %69 = arith.mulf %67, %68 : vector<16x16xf32>
    %70 = arith.addf %69, %12 : vector<16x16xf32>
    %cst_27 = arith.constant dense<0xFF800000> : vector<16xf32>
    %71 = vector.multi_reduction <maximumf>, %70, %cst_27 [1] : vector<16x16xf32> to vector<16xf32>
    %72 = vector.shape_cast %71 : vector<16xf32> to vector<16x1xf32>
    %73 = vector.broadcast %72 : vector<16x1xf32> to vector<16x16xf32>
    %74 = arith.subf %70, %73 : vector<16x16xf32>
    %75 = math.exp %74 : vector<16x16xf32>
    %cst_28 = arith.constant dense<0.000000e+00> : vector<16xf32>
    %76 = vector.multi_reduction <add>, %75, %cst_28 [1] : vector<16x16xf32> to vector<16xf32>
    %77 = vector.shape_cast %76 : vector<16xf32> to vector<16x1xf32>
    %78 = vector.broadcast %77 : vector<16x1xf32> to vector<16x16xf32>
    %79 = arith.divf %75, %78 : vector<16x16xf32>
    %cst_29 = arith.constant dense<0.000000e+00> : vector<16x8xf32>
    %80 = tpu.matmul %79, %66, %cst_29 {dimension_numbers = #tpu.dot_dimension_numbers<[1], [0], [0], [1], [0, 0, 1, 1], [], []>} : vector<16x16xf32>, vector<16x8xf32>, vector<16x8xf32> -> vector<16x8xf32>
    %81 = tpu.concatenate %29, %46, %63, %80 in 1 : vector<16x8xf32>, vector<16x8xf32>, vector<16x8xf32>, vector<16x8xf32> -> vector<16x32xf32>
    %c0_30 = arith.constant 0 : index
    %c0_31 = arith.constant 0 : index
    %82 = vector.load %arg5[%c0_30, %c0_31] : memref<32x128xf32, #tpu.memory_space<vmem>>, vector<32x128xf32>
    %cst_32 = arith.constant dense<0.000000e+00> : vector<16x128xf32>
    %83 = tpu.matmul %81, %82, %cst_32 {dimension_numbers = #tpu.dot_dimension_numbers<[1], [0], [0], [1], [0, 0, 1, 1], [], []>} : vector<16x32xf32>, vector<32x128xf32>, vector<16x128xf32> -> vector<16x128xf32>
    %c0_33 = arith.constant 0 : index
    %c0_34 = arith.constant 0 : index
    %84 = vector.load %arg6[%c0_33, %c0_34] : memref<1x128xf32, #tpu.memory_space<vmem>>, vector<1x128xf32>
    %85 = vector.broadcast %84 : vector<1x128xf32> to vector<16x128xf32>
    %86 = arith.addf %83, %85 : vector<16x128xf32>
    %cst_35 = arith.constant 0.000000e+00 : f32
    %87 = vector.broadcast %cst_35 : f32 to vector<16x128xf32>
    %88 = arith.maximumf %86, %87 : vector<16x128xf32>
    %c0_36 = arith.constant 0 : index
    %c0_37 = arith.constant 0 : index
    %89 = vector.load %arg7[%c0_36, %c0_37] : memref<128x128xf32, #tpu.memory_space<vmem>>, vector<128x128xf32>
    %cst_38 = arith.constant dense<0.000000e+00> : vector<16x128xf32>
    %90 = tpu.matmul %88, %89, %cst_38 {dimension_numbers = #tpu.dot_dimension_numbers<[1], [0], [0], [1], [0, 0, 1, 1], [], []>} : vector<16x128xf32>, vector<128x128xf32>, vector<16x128xf32> -> vector<16x128xf32>
    %c0_39 = arith.constant 0 : index
    %c0_40 = arith.constant 0 : index
    %91 = vector.load %arg8[%c0_39, %c0_40] : memref<1x128xf32, #tpu.memory_space<vmem>>, vector<1x128xf32>
    %92 = vector.broadcast %91 : vector<1x128xf32> to vector<16x128xf32>
    %93 = arith.addf %90, %92 : vector<16x128xf32>
    %c0_41 = arith.constant 0 : index
    %c0_42 = arith.constant 0 : index
    %94 = vector.load %arg9[%c0_41, %c0_42] : memref<16x128xf32, #tpu.memory_space<vmem>>, vector<16x128xf32>
    tpu.vector_store %arg9[%c0_41, %c0_42], %93 {strides = array<i32>} : memref<16x128xf32, #tpu.memory_space<vmem>>, vector<16x128xf32>,
    return
  }
}

</mosaic_0001>

<llo_original>
// kernel: tpu_custom_call.1
$region0: #{tpu_custom_call.1}
  #allocation0 [shape = 'u32[]', space=smem, size = 0x4, offset = 0x4, fixed_abs, tag = 'smem constant byte address 0x4 - core index']
  #allocation1 [shape = 'u32[72,128]{1,0:T(1,128)}', space=vmem, size = 0x9000, scoped, tag = 'internal scratch']
  %s0 = inlined_call_operand.vmem [shape: s32[16,1], index: 0, kind: input, shape index: {}]
  %s1 = inlined_call_operand.vmem [shape: f32[128,32], index: 1, kind: input, shape index: {}]
  %s2 = inlined_call_operand.vmem [shape: f32[16,32], index: 2, kind: input, shape index: {}]
  %s3 = inlined_call_operand.hbm [shape: f32[16,16], index: 3, kind: input, shape index: {}]
  %s4 = inlined_call_operand.vmem [shape: f32[32,96], index: 4, kind: input, shape index: {}]
  %s5 = inlined_call_operand.hbm [shape: f32[32,128], index: 5, kind: input, shape index: {}]
  %s6 = inlined_call_operand.vmem [shape: f32[1,128], index: 6, kind: input, shape index: {}]
  %s7 = inlined_call_operand.vmem [shape: f32[128,128], index: 7, kind: input, shape index: {}]
  %s8 = inlined_call_operand.vmem [shape: f32[1,128], index: 8, kind: input, shape index: {}]
  %s9 = inlined_call_operand.hbm [shape: f32[16,128], index: 9, kind: output, shape index: {}]
  %s10 = sld [smem:[#allocation0]]
  $region54: #{tpu_custom_call.1} parent=0
    _
  %s12 = ssub.s32 1, %s10
  %s13 = scalar_select 0, %s12, %s10
  $region1: #{tpu_custom_call.1} parent=0
    #allocation2 [shape = 'u8[8192]{0}', space=vmem, size = 0x2000, scoped, tag = 'input window, operand 3, single buffered']
    #allocation3 [shape = 's32[1]{0}', space=sflag, size = 0x4, scoped, tag = 'scoped memory for tpu_custom_call.1']
    #allocation4 [shape = 's32[1]{0}', space=sflag, size = 0x4, scoped, tag = 'scoped memory for tpu_custom_call.1']
    #allocation5 [shape = 'u8[16384]{0}', space=vmem, size = 0x4000, scoped, tag = 'input window, operand 5, single buffered']
    #allocation6 [shape = 's32[1]{0}', space=sflag, size = 0x4, scoped, tag = 'scoped memory for tpu_custom_call.1']
    #allocation7 [shape = 'u8[8192]{0}', space=vmem, size = 0x2000, scoped, tag = 'output window, operand 0, single buffered']
    %14 = vsyncpa [#allocation3], 0
    %15 = vsyncpa [#allocation6], 0
    %16 = vsyncpa [#allocation4], 0
    // Predicated region
    $region2: #{tpu_custom_call.1} parent=1 // pred_check
      _
    $region3: #{tpu_custom_call.1} parent=1 // pred_check_branch
      %18 = sbr.rel (0) target = $region5
    $region4: #{tpu_custom_call.1} parent=1 // pred_region
      _
    $region5: #{tpu_custom_call.1} parent=1 // pred_fallthru
      _
    // Predicated region
    $region6: #{tpu_custom_call.1} parent=1 // pred_check
      _
    $region7: #{tpu_custom_call.1} parent=1 // pred_check_branch
      %20 = sbr.rel (0) target = $region9
    $region8: #{tpu_custom_call.1} parent=1 // pred_region
      _
    $region9: #{tpu_custom_call.1} parent=1 // pred_fallthru
      _
    // Predicated region
    $region10: #{tpu_custom_call.1} parent=1 // pred_check
      _
    $region11: #{tpu_custom_call.1} parent=1 // pred_check_branch
      %22 = sbr.rel (0) target = $region13
    $region12: #{tpu_custom_call.1} parent=1 // pred_region
      _
    $region13: #{tpu_custom_call.1} parent=1 // pred_fallthru
      _
    // Predicated region
    $region14: #{tpu_custom_call.1} parent=1 // pred_check
      _
    $region15: #{tpu_custom_call.1} parent=1 // pred_check_branch
      %24 = sbr.rel (0) target = $region17
    $region16: #{tpu_custom_call.1} parent=1 // pred_region
      %26 = vsyncadd [#allocation3], 0
      %s27 = sshll.u32 %s3, 4
      %s28 = int_to_ptr.hbm [resolvable:$true] %s27
      %s29 = sshll.u32 [#allocation2], 4
      %s30 = int_to_ptr.vmem [resolvable:$true] %s29
      %35 = dma.hbm_to_vmem [thread:$0]  %s28, 256, %s30, [#allocation3], 128, 128, 8
    $region17: #{tpu_custom_call.1} parent=1 // pred_fallthru
      _
    // Predicated region
    $region18: #{tpu_custom_call.1} parent=1 // pred_check
      _
    $region19: #{tpu_custom_call.1} parent=1 // pred_check_branch
      %37 = sbr.rel (0) target = $region21
    $region20: #{tpu_custom_call.1} parent=1 // pred_region
      _
    $region21: #{tpu_custom_call.1} parent=1 // pred_fallthru
      _
    // Predicated region
    $region22: #{tpu_custom_call.1} parent=1 // pred_check
      _
    $region23: #{tpu_custom_call.1} parent=1 // pred_check_branch
      %39 = sbr.rel (0) target = $region25
    $region24: #{tpu_custom_call.1} parent=1 // pred_region
      %41 = vsyncadd [#allocation6], 0
      %s42 = sshll.u32 %s5, 4
      %s43 = int_to_ptr.hbm [resolvable:$true] %s42
      %s44 = sshll.u32 [#allocation5], 4
      %s45 = int_to_ptr.vmem [resolvable:$true] %s44
      %50 = dma.hbm_to_vmem [thread:$0]  %s43, 512, %s45, [#allocation6], 128, 128, 8
    $region25: #{tpu_custom_call.1} parent=1 // pred_fallthru
      _
    // Predicated region
    $region26: #{tpu_custom_call.1} parent=1 // pred_check
      _
    $region27: #{tpu_custom_call.1} parent=1 // pred_check_branch
      %52 = sbr.rel (0) target = $region29
    $region28: #{tpu_custom_call.1} parent=1 // pred_region
      _
    $region29: #{tpu_custom_call.1} parent=1 // pred_fallthru
      _
    // Predicated region
    $region30: #{tpu_custom_call.1} parent=1 // pred_check
      _
    $region31: #{tpu_custom_call.1} parent=1 // pred_check_branch
      %54 = sbr.rel (0) target = $region33
    $region32: #{tpu_custom_call.1} parent=1 // pred_region
      _
    $region33: #{tpu_custom_call.1} parent=1 // pred_fallthru
      _
    // Predicated region
    $region34: #{tpu_custom_call.1} parent=1 // pred_check
      _
    $region35: #{tpu_custom_call.1} parent=1 // pred_check_branch
      %56 = sbr.rel (0) target = $region37
    $region36: #{tpu_custom_call.1} parent=1 // pred_region
      _
    $region37: #{tpu_custom_call.1} parent=1 // pred_fallthru
      _
    // Predicated region
    $region38: #{tpu_custom_call.1} parent=1 // pred_check
      _
    $region39: #{tpu_custom_call.1} parent=1 // pred_check_branch
      %58 = sbr.rel (0) target = $region41
    $region40: #{tpu_custom_call.1} parent=1 // pred_region
      %60 = dma.done [#allocation3], 256
    $region41: #{tpu_custom_call.1} parent=1 // pred_fallthru
      _
    // Predicated region
    $region42: #{tpu_custom_call.1} parent=1 // pred_check
      _
    $region43: #{tpu_custom_call.1} parent=1 // pred_check_branch
      %62 = sbr.rel (0) target = $region45
    $region44: #{tpu_custom_call.1} parent=1 // pred_region
      %64 = dma.done [#allocation6], 512
    $region45: #{tpu_custom_call.1} parent=1 // pred_fallthru
      _
    %v65 = vld [vmem:[%s0] sm:$0xff]
    %v66 = vld [vmem:[%s0 + $0x8] sm:$0xff]
    %v67 = vlaneseq
    %v68 = vand.u32 %v67, 127
    %69 = vset.pattern.permute.xlu0 0
    %70 = vperm.xlu0 %69, %v65
    %v71 = vpop.permute.xlu0 %70
    %72 = vset.pattern.permute.xlu0 0
    %73 = vperm.xlu0 %72, %v66
    %v74 = vpop.permute.xlu0 %73
    %vm75 = vcmp.eq.s32.totalorder %v71, %v68
    %vm76 = vcmp.eq.s32.totalorder %v74, %v68
    %v77 = vsel %vm75, 1, 0
    %v78 = vsel %vm76, 1, 0
    %v79 = vcvt.s32.f32 %v77
    %v80 = vcvt.s32.f32 %v78
    %v81 = vld [vmem:[%s1] sm:$0xff]
    %v82 = vld [vmem:[%s1 + $0x8] sm:$0xff]
    %v83 = vld [vmem:[%s1 + $0x10] sm:$0xff]
    %v84 = vld [vmem:[%s1 + $0x18] sm:$0xff]
    %v85 = vld [vmem:[%s1 + $0x20] sm:$0xff]
    %v86 = vld [vmem:[%s1 + $0x28] sm:$0xff]
    %v87 = vld [vmem:[%s1 + $0x30] sm:$0xff]
    %v88 = vld [vmem:[%s1 + $0x38] sm:$0xff]
    %v89 = vld [vmem:[%s1 + $0x40] sm:$0xff]
    %v90 = vld [vmem:[%s1 + $0x48] sm:$0xff]
    %v91 = vld [vmem:[%s1 + $0x50] sm:$0xff]
    %v92 = vld [vmem:[%s1 + $0x58] sm:$0xff]
    %v93 = vld [vmem:[%s1 + $0x60] sm:$0xff]
    %v94 = vld [vmem:[%s1 + $0x68] sm:$0xff]
    %v95 = vld [vmem:[%s1 + $0x70] sm:$0xff]
    %v96 = vld [vmem:[%s1 + $0x78] sm:$0xff]
    %v97 = vld [vmem:[%s2] sm:$0xff]
    %v98 = vld [vmem:[%s2 + $0x8] sm:$0xff]
    %99 = vmatpush.msra.mxu0 %v96
    %100 = vmatpush.msra.mxu0 %v95
    %101 = vmatpush.msra.mxu0 %v94
    %102 = vmatpush.msra.mxu0 %v93
    %103 = vmatpush.msra.mxu0 %v92
    %104 = vmatpush.msra.mxu0 %v91
    %105 = vmatpush.msra.mxu0 %v90
    %106 = vmatpush.msra.mxu0 %v89
    %107 = vmatpush.msra.mxu0 %v88
    %108 = vmatpush.msra.mxu0 %v87
    %109 = vmatpush.msra.mxu0 %v86
    %110 = vmatpush.msra.mxu0 %v85
    %111 = vmatpush.msra.mxu0 %v84
    %112 = vmatpush.msra.mxu0 %v83
    %113 = vmatpush.msra.mxu0 %v82
    %114 = vmatpush.msra.mxu0 %v81
    %115 = vmatmul.f32.gmra.mxu0 %v79
    %v116 = vpop.f32.mrf.mxu0
    %v117 = vadd.f32 %v97, %v116
    %118 = vmatmul.f32.gmra.mxu0 %v80
    %v119 = vpop.f32.mrf.mxu0
    %v120 = vadd.f32 %v98, %v119
    %121 = vdwg.mxu0
    %v122 = vld [vmem:[%s4] sm:$0xff]
    %v123 = vld [vmem:[%s4 + $0x8] sm:$0xff]
    %v124 = vld [vmem:[%s4 + $0x10] sm:$0xff]
    %v125 = vld [vmem:[%s4 + $0x18] sm:$0xff]
    %vm126 = vcmask 261120
    %v128 = vsel %vm126, %v117, 0
    %v131 = vsel %vm126, %v120, 0
    %133 = vmatpush.msra.mxu0 0.0
    %134 = vmatpush.msra.mxu0 0.0
    %135 = vmatpush.msra.mxu0 0.0
    %136 = vmatpush.msra.mxu0 0.0
    %137 = vmatpush.msra.mxu0 0.0
    %138 = vmatpush.msra.mxu0 0.0
    %139 = vmatpush.msra.mxu0 0.0
    %140 = vmatpush.msra.mxu0 0.0
    %141 = vmatpush.msra.mxu0 0.0
    %142 = vmatpush.msra.mxu0 0.0
    %143 = vmatpush.msra.mxu0 0.0
    %144 = vmatpush.msra.mxu0 0.0
    %145 = vmatpush.msra.mxu0 %v125
    %146 = vmatpush.msra.mxu0 %v124
    %147 = vmatpush.msra.mxu0 %v123
    %148 = vmatpush.msra.mxu0 %v122
    %149 = vmatmul.f32.gmra.mxu0 %v128
    %v150 = vpop.f32.mrf.mxu0
    %v151 = vadd.f32 0.0, %v150
    %152 = vmatmul.f32.gmra.mxu0 %v131
    %v153 = vpop.f32.mrf.mxu0
    %v154 = vadd.f32 0.0, %v153
    %155 = vdwg.mxu0
    %v156 = vld [vmem:[#allocation2] sm:$0xff]
    %v157 = vld [vmem:[#allocation2 + $0x8] sm:$0xff]
    %160 = vrot.lane.b32.xlu0 %v151, 96
    %v161 = vpop.permute.xlu0 %160
    %162 = vrot.lane.b32.xlu0 %v154, 96
    %v163 = vpop.permute.xlu0 %162
    %vm164 = vcmask 64512
    %v165 = vsel %vm164, %v151, 0
    %v167 = vsel %vm164, %v154, 0
    %v169 = vsel %vm164, %v161, 0
    %v171 = vsel %vm164, %v163, 0
    %173 = vmatpush.xpose.msra.mxu0 0.0
    %174 = vmatpush.xpose.msra.mxu0 0.0
    %175 = vmatpush.xpose.msra.mxu0 0.0
    %176 = vmatpush.xpose.msra.mxu0 0.0
    %177 = vmatpush.xpose.msra.mxu0 0.0
    %178 = vmatpush.xpose.msra.mxu0 0.0
    %179 = vmatpush.xpose.msra.mxu0 0.0
    %180 = vmatpush.xpose.msra.mxu0 0.0
    %181 = vmatpush.xpose.msra.mxu0 0.0
    %182 = vmatpush.xpose.msra.mxu0 0.0
    %183 = vmatpush.xpose.msra.mxu0 0.0
    %184 = vmatpush.xpose.msra.mxu0 0.0
    %185 = vmatpush.xpose.msra.mxu0 0.0
    %186 = vmatpush.xpose.msra.mxu0 0.0
    %187 = vmatpush.xpose.msra.mxu0 %v171
    %188 = vmatpush.xpose.msra.mxu0 %v169
    %189 = vmatmul.f32.gmra.mxu0 %v165
    %v190 = vpop.f32.mrf.mxu0
    %v191 = vadd.f32 0.0, %v190
    %192 = vmatmul.f32.gmra.mxu0 %v167
    %v193 = vpop.f32.mrf.mxu0
    %v194 = vadd.f32 0.0, %v193
    %195 = vdwg.mxu0
    %v196 = vmul.f32 %v191, 0.17677669
    %v197 = vmul.f32 %v194, 0.17677669
    %v198 = vadd.f32 %v196, %v156
    %v199 = vadd.f32 %v197, %v157
    %vm200 = vcmask 130048
    %v201 = vsel %vm200, %v198, -inf
    %202 = vmax.xlane.f32.xlu0 %v201
    %v203 = vpop.xlane.xlu0 %202
    %v204 = vsel %vm200, %v199, -inf
    %205 = vmax.xlane.f32.xlu0 %v204
    %v206 = vpop.xlane.xlu0 %205
    %v207 = vsub.f32 %v198, %v203
    %v208 = vsub.f32 %v199, %v206
    %v209 = vmul.f32 %v207, 1.442695
    %v210 = vpow.pop %v209
    %v211 = vmul.f32 %v208, 1.442695
    %v212 = vpow.pop %v211
    %v213 = vsel %vm200, %v210, 0.0
    %214 = vadd.xlane.f32.xlu0 %v213
    %v215 = vpop.xlane.xlu0 %214
    %v216 = vsel %vm200, %v212, 0.0
    %217 = vadd.xlane.f32.xlu0 %v216
    %v218 = vpop.xlane.xlu0 %217
    %v219 = vrcp.pop %v215
    %v220 = vmul.f32 %v215, %v219
    %v221 = vsub.f32 1.0, %v220
    %v222 = vmul.f32 %v219, %v221
    %v223 = vadd.f32 %v219, %v222
    %vm224 = vweird.f32 %v215
    %vm225 = vweird.f32 %v219
    %vm226 = vmor %vm224, %vm225
    %v227 = vsel %vm226, %v219, %v223
    %v228 = vand.u32 2147483647, %v215
    %vm229 = vcmp.eq.f32.partialorder %v228, 8.507059e+37
    %v230 = vand.u32 %v215, 2147483648
    %v231 = vor.u32 1.1754944e-38, %v230
    %v232 = vsel %vm229, %v231, %v227
    %v233 = vmul.f32 %v210, %v232
    %v234 = vrcp.pop %v218
    %v235 = vmul.f32 %v218, %v234
    %v236 = vsub.f32 1.0, %v235
    %v237 = vmul.f32 %v234, %v236
    %v238 = vadd.f32 %v234, %v237
    %vm239 = vweird.f32 %v218
    %vm240 = vweird.f32 %v234
    %vm241 = vmor %vm239, %vm240
    %v242 = vsel %vm241, %v234, %v238
    %v243 = vand.u32 2147483647, %v218
    %vm244 = vcmp.eq.f32.partialorder %v243, 8.507059e+37
    %v245 = vand.u32 %v218, 2147483648
    %v246 = vor.u32 1.1754944e-38, %v245
    %v247 = vsel %vm244, %v246, %v242
    %v248 = vmul.f32 %v212, %v247
    %249 = vrot.lane.b32.xlu0 %v151, 64
    %v250 = vpop.permute.xlu0 %249
    %251 = vrot.lane.b32.xlu0 %v154, 64
    %v252 = vpop.permute.xlu0 %251
    %v256 = vsel %vm200, %v233, 0
    %v259 = vsel %vm200, %v248, 0
    %261 = vmatpush.msra.mxu0 0.0
    %262 = vmatpush.msra.mxu0 0.0
    %263 = vmatpush.msra.mxu0 0.0
    %264 = vmatpush.msra.mxu0 0.0
    %265 = vmatpush.msra.mxu0 0.0
    %266 = vmatpush.msra.mxu0 0.0
    %267 = vmatpush.msra.mxu0 0.0
    %268 = vmatpush.msra.mxu0 0.0
    %269 = vmatpush.msra.mxu0 0.0
    %270 = vmatpush.msra.mxu0 0.0
    %271 = vmatpush.msra.mxu0 0.0
    %272 = vmatpush.msra.mxu0 0.0
    %273 = vmatpush.msra.mxu0 0.0
    %274 = vmatpush.msra.mxu0 0.0
    %275 = vmatpush.msra.mxu0 %v252
    %276 = vmatpush.msra.mxu0 %v250
    %277 = vmatmul.f32.gmra.mxu0 %v256
    %v278 = vpop.f32.mrf.mxu0
    %v279 = vadd.f32 0.0, %v278
    %280 = vmatmul.f32.gmra.mxu0 %v259
    %v281 = vpop.f32.mrf.mxu0
    %v282 = vadd.f32 0.0, %v281
    %283 = vdwg.mxu0
    %284 = vrot.lane.b32.xlu0 %v151, 120
    %v285 = vpop.permute.xlu0 %284
    %286 = vrot.lane.b32.xlu0 %v154, 120
    %v287 = vpop.permute.xlu0 %286
    %288 = vrot.lane.b32.xlu0 %v151, 88
    %v289 = vpop.permute.xlu0 %288
    %290 = vrot.lane.b32.xlu0 %v154, 88
    %v291 = vpop.permute.xlu0 %290
    %v292 = vsel %vm164, %v285, 0
    %v294 = vsel %vm164, %v287, 0
    %v296 = vsel %vm164, %v289, 0
    %v298 = vsel %vm164, %v291, 0
    %300 = vmatpush.xpose.msra.mxu0 0.0
    %301 = vmatpush.xpose.msra.mxu0 0.0
    %302 = vmatpush.xpose.msra.mxu0 0.0
    %303 = vmatpush.xpose.msra.mxu0 0.0
    %304 = vmatpush.xpose.msra.mxu0 0.0
    %305 = vmatpush.xpose.msra.mxu0 0.0
    %306 = vmatpush.xpose.msra.mxu0 0.0
    %307 = vmatpush.xpose.msra.mxu0 0.0
    %308 = vmatpush.xpose.msra.mxu0 0.0
    %309 = vmatpush.xpose.msra.mxu0 0.0
    %310 = vmatpush.xpose.msra.mxu0 0.0
    %311 = vmatpush.xpose.msra.mxu0 0.0
    %312 = vmatpush.xpose.msra.mxu0 0.0
    %313 = vmatpush.xpose.msra.mxu0 0.0
    %314 = vmatpush.xpose.msra.mxu0 %v298
    %315 = vmatpush.xpose.msra.mxu0 %v296
    %316 = vmatmul.f32.gmra.mxu0 %v292
    %v317 = vpop.f32.mrf.mxu0
    %v318 = vadd.f32 0.0, %v317
    %319 = vmatmul.f32.gmra.mxu0 %v294
    %v320 = vpop.f32.mrf.mxu0
    %v321 = vadd.f32 0.0, %v320
    %322 = vdwg.mxu0
    %v323 = vmul.f32 %v318, 0.17677669
    %v324 = vmul.f32 %v321, 0.17677669
    %v325 = vadd.f32 %v323, %v156
    %v326 = vadd.f32 %v324, %v157
    %v327 = vsel %vm200, %v325, -inf
    %328 = vmax.xlane.f32.xlu0 %v327
    %v329 = vpop.xlane.xlu0 %328
    %v330 = vsel %vm200, %v326, -inf
    %331 = vmax.xlane.f32.xlu0 %v330
    %v332 = vpop.xlane.xlu0 %331
    %v333 = vsub.f32 %v325, %v329
    %v334 = vsub.f32 %v326, %v332
    %v335 = vmul.f32 %v333, 1.442695
    %v336 = vpow.pop %v335
    %v337 = vmul.f32 %v334, 1.442695
    %v338 = vpow.pop %v337
    %v339 = vsel %vm200, %v336, 0.0
    %340 = vadd.xlane.f32.xlu0 %v339
    %v341 = vpop.xlane.xlu0 %340
    %v342 = vsel %vm200, %v338, 0.0
    %343 = vadd.xlane.f32.xlu0 %v342
    %v344 = vpop.xlane.xlu0 %343
    %v345 = vrcp.pop %v341
    %v346 = vmul.f32 %v341, %v345
    %v347 = vsub.f32 1.0, %v346
    %v348 = vmul.f32 %v345, %v347
    %v349 = vadd.f32 %v345, %v348
    %vm350 = vweird.f32 %v341
    %vm351 = vweird.f32 %v345
    %vm352 = vmor %vm350, %vm351
    %v353 = vsel %vm352, %v345, %v349
    %v354 = vand.u32 2147483647, %v341
    %vm355 = vcmp.eq.f32.partialorder %v354, 8.507059e+37
    %v356 = vand.u32 %v341, 2147483648
    %v357 = vor.u32 1.1754944e-38, %v356
    %v358 = vsel %vm355, %v357, %v353
    %v359 = vmul.f32 %v336, %v358
    %v360 = vrcp.pop %v344
    %v361 = vmul.f32 %v344, %v360
    %v362 = vsub.f32 1.0, %v361
    %v363 = vmul.f32 %v360, %v362
    %v364 = vadd.f32 %v360, %v363
    %vm365 = vweird.f32 %v344
    %vm366 = vweird.f32 %v360
    %vm367 = vmor %vm365, %vm366
    %v368 = vsel %vm367, %v360, %v364
    %v369 = vand.u32 2147483647, %v344
    %vm370 = vcmp.eq.f32.partialorder %v369, 8.507059e+37
    %v371 = vand.u32 %v344, 2147483648
    %v372 = vor.u32 1.1754944e-38, %v371
    %v373 = vsel %vm370, %v372, %v368
    %v374 = vmul.f32 %v338, %v373
    %375 = vrot.lane.b32.xlu0 %v151, 56
    %v376 = vpop.permute.xlu0 %375
    %377 = vrot.lane.b32.xlu0 %v154, 56
    %v378 = vpop.permute.xlu0 %377
    %v382 = vsel %vm200, %v359, 0
    %v385 = vsel %vm200, %v374, 0
    %387 = vmatpush.msra.mxu0 0.0
    %388 = vmatpush.msra.mxu0 0.0
    %389 = vmatpush.msra.mxu0 0.0
    %390 = vmatpush.msra.mxu0 0.0
    %391 = vmatpush.msra.mxu0 0.0
    %392 = vmatpush.msra.mxu0 0.0
    %393 = vmatpush.msra.mxu0 0.0
    %394 = vmatpush.msra.mxu0 0.0
    %395 = vmatpush.msra.mxu0 0.0
    %396 = vmatpush.msra.mxu0 0.0
    %397 = vmatpush.msra.mxu0 0.0
    %398 = vmatpush.msra.mxu0 0.0
    %399 = vmatpush.msra.mxu0 0.0
    %400 = vmatpush.msra.mxu0 0.0
    %401 = vmatpush.msra.mxu0 %v378
    %402 = vmatpush.msra.mxu0 %v376
    %403 = vmatmul.f32.gmra.mxu0 %v382
    %v404 = vpop.f32.mrf.mxu0
    %v405 = vadd.f32 0.0, %v404
    %406 = vmatmul.f32.gmra.mxu0 %v385
    %v407 = vpop.f32.mrf.mxu0
    %v408 = vadd.f32 0.0, %v407
    %409 = vdwg.mxu0
    %410 = vrot.lane.b32.xlu0 %v151, 112
    %v411 = vpop.permute.xlu0 %410
    %412 = vrot.lane.b32.xlu0 %v154, 112
    %v413 = vpop.permute.xlu0 %412
    %414 = vrot.lane.b32.xlu0 %v151, 80
    %v415 = vpop.permute.xlu0 %414
    %416 = vrot.lane.b32.xlu0 %v154, 80
    %v417 = vpop.permute.xlu0 %416
    %v418 = vsel %vm164, %v411, 0
    %v420 = vsel %vm164, %v413, 0
    %v422 = vsel %vm164, %v415, 0
    %v424 = vsel %vm164, %v417, 0
    %426 = vmatpush.xpose.msra.mxu0 0.0
    %427 = vmatpush.xpose.msra.mxu0 0.0
    %428 = vmatpush.xpose.msra.mxu0 0.0
    %429 = vmatpush.xpose.msra.mxu0 0.0
    %430 = vmatpush.xpose.msra.mxu0 0.0
    %431 = vmatpush.xpose.msra.mxu0 0.0
    %432 = vmatpush.xpose.msra.mxu0 0.0
    %433 = vmatpush.xpose.msra.mxu0 0.0
    %434 = vmatpush.xpose.msra.mxu0 0.0
    %435 = vmatpush.xpose.msra.mxu0 0.0
    %436 = vmatpush.xpose.msra.mxu0 0.0
    %437 = vmatpush.xpose.msra.mxu0 0.0
    %438 = vmatpush.xpose.msra.mxu0 0.0
    %439 = vmatpush.xpose.msra.mxu0 0.0
    %440 = vmatpush.xpose.msra.mxu0 %v424
    %441 = vmatpush.xpose.msra.mxu0 %v422
    %442 = vmatmul.f32.gmra.mxu0 %v418
    %v443 = vpop.f32.mrf.mxu0
    %v444 = vadd.f32 0.0, %v443
    %445 = vmatmul.f32.gmra.mxu0 %v420
    %v446 = vpop.f32.mrf.mxu0
    %v447 = vadd.f32 0.0, %v446
    %448 = vdwg.mxu0
    %v449 = vmul.f32 %v444, 0.17677669
    %v450 = vmul.f32 %v447, 0.17677669
    %v451 = vadd.f32 %v449, %v156
    %v452 = vadd.f32 %v450, %v157
    %v453 = vsel %vm200, %v451, -inf
    %454 = vmax.xlane.f32.xlu0 %v453
    %v455 = vpop.xlane.xlu0 %454
    %v456 = vsel %vm200, %v452, -inf
    %457 = vmax.xlane.f32.xlu0 %v456
    %v458 = vpop.xlane.xlu0 %457
    %v459 = vsub.f32 %v451, %v455
    %v460 = vsub.f32 %v452, %v458
    %v461 = vmul.f32 %v459, 1.442695
    %v462 = vpow.pop %v461
    %v463 = vmul.f32 %v460, 1.442695
    %v464 = vpow.pop %v463
    %v465 = vsel %vm200, %v462, 0.0
    %466 = vadd.xlane.f32.xlu0 %v465
    %v467 = vpop.xlane.xlu0 %466
    %v468 = vsel %vm200, %v464, 0.0
    %469 = vadd.xlane.f32.xlu0 %v468
    %v470 = vpop.xlane.xlu0 %469
    %v471 = vrcp.pop %v467
    %v472 = vmul.f32 %v467, %v471
    %v473 = vsub.f32 1.0, %v472
    %v474 = vmul.f32 %v471, %v473
    %v475 = vadd.f32 %v471, %v474
    %vm476 = vweird.f32 %v467
    %vm477 = vweird.f32 %v471
    %vm478 = vmor %vm476, %vm477
    %v479 = vsel %vm478, %v471, %v475
    %v480 = vand.u32 2147483647, %v467
    %vm481 = vcmp.eq.f32.partialorder %v480, 8.507059e+37
    %v482 = vand.u32 %v467, 2147483648
    %v483 = vor.u32 1.1754944e-38, %v482
    %v484 = vsel %vm481, %v483, %v479
    %v485 = vmul.f32 %v462, %v484
    %v486 = vrcp.pop %v470
    %v487 = vmul.f32 %v470, %v486
    %v488 = vsub.f32 1.0, %v487
    %v489 = vmul.f32 %v486, %v488
    %v490 = vadd.f32 %v486, %v489
    %vm491 = vweird.f32 %v470
    %vm492 = vweird.f32 %v486
    %vm493 = vmor %vm491, %vm492
    %v494 = vsel %vm493, %v486, %v490
    %v495 = vand.u32 2147483647, %v470
    %vm496 = vcmp.eq.f32.partialorder %v495, 8.507059e+37
    %v497 = vand.u32 %v470, 2147483648
    %v498 = vor.u32 1.1754944e-38, %v497
    %v499 = vsel %vm496, %v498, %v494
    %v500 = vmul.f32 %v464, %v499
    %501 = vrot.lane.b32.xlu0 %v151, 48
    %v502 = vpop.permute.xlu0 %501
    %503 = vrot.lane.b32.xlu0 %v154, 48
    %v504 = vpop.permute.xlu0 %503
    %v508 = vsel %vm200, %v485, 0
    %v511 = vsel %vm200, %v500, 0
    %513 = vmatpush.msra.mxu0 0.0
    %514 = vmatpush.msra.mxu0 0.0
    %515 = vmatpush.msra.mxu0 0.0
    %516 = vmatpush.msra.mxu0 0.0
    %517 = vmatpush.msra.mxu0 0.0
    %518 = vmatpush.msra.mxu0 0.0
    %519 = vmatpush.msra.mxu0 0.0
    %520 = vmatpush.msra.mxu0 0.0
    %521 = vmatpush.msra.mxu0 0.0
    %522 = vmatpush.msra.mxu0 0.0
    %523 = vmatpush.msra.mxu0 0.0
    %524 = vmatpush.msra.mxu0 0.0
    %525 = vmatpush.msra.mxu0 0.0
    %526 = vmatpush.msra.mxu0 0.0
    %527 = vmatpush.msra.mxu0 %v504
    %528 = vmatpush.msra.mxu0 %v502
    %529 = vmatmul.f32.gmra.mxu0 %v508
    %v530 = vpop.f32.mrf.mxu0
    %v531 = vadd.f32 0.0, %v530
    %532 = vmatmul.f32.gmra.mxu0 %v511
    %v533 = vpop.f32.mrf.mxu0
    %v534 = vadd.f32 0.0, %v533
    %535 = vdwg.mxu0
    %536 = vrot.lane.b32.xlu0 %v151, 104
    %v537 = vpop.permute.xlu0 %536
    %538 = vrot.lane.b32.xlu0 %v154, 104
    %v539 = vpop.permute.xlu0 %538
    %540 = vrot.lane.b32.xlu0 %v151, 72
    %v541 = vpop.permute.xlu0 %540
    %542 = vrot.lane.b32.xlu0 %v154, 72
    %v543 = vpop.permute.xlu0 %542
    %v544 = vsel %vm164, %v537, 0
    %v546 = vsel %vm164, %v539, 0
    %v548 = vsel %vm164, %v541, 0
    %v550 = vsel %vm164, %v543, 0
    %552 = vmatpush.xpose.msra.mxu0 0.0
    %553 = vmatpush.xpose.msra.mxu0 0.0
    %554 = vmatpush.xpose.msra.mxu0 0.0
    %555 = vmatpush.xpose.msra.mxu0 0.0
    %556 = vmatpush.xpose.msra.mxu0 0.0
    %557 = vmatpush.xpose.msra.mxu0 0.0
    %558 = vmatpush.xpose.msra.mxu0 0.0
    %559 = vmatpush.xpose.msra.mxu0 0.0
    %560 = vmatpush.xpose.msra.mxu0 0.0
    %561 = vmatpush.xpose.msra.mxu0 0.0
    %562 = vmatpush.xpose.msra.mxu0 0.0
    %563 = vmatpush.xpose.msra.mxu0 0.0
    %564 = vmatpush.xpose.msra.mxu0 0.0
    %565 = vmatpush.xpose.msra.mxu0 0.0
    %566 = vmatpush.xpose.msra.mxu0 %v550
    %567 = vmatpush.xpose.msra.mxu0 %v548
    %568 = vmatmul.f32.gmra.mxu0 %v544
    %v569 = vpop.f32.mrf.mxu0
    %v570 = vadd.f32 0.0, %v569
    %571 = vmatmul.f32.gmra.mxu0 %v546
    %v572 = vpop.f32.mrf.mxu0
    %v573 = vadd.f32 0.0, %v572
    %574 = vdwg.mxu0
    %v575 = vmul.f32 %v570, 0.17677669
    %v576 = vmul.f32 %v573, 0.17677669
    %v577 = vadd.f32 %v575, %v156
    %v578 = vadd.f32 %v576, %v157
    %v579 = vsel %vm200, %v577, -inf
    %580 = vmax.xlane.f32.xlu0 %v579
    %v581 = vpop.xlane.xlu0 %580
    %v582 = vsel %vm200, %v578, -inf
    %583 = vmax.xlane.f32.xlu0 %v582
    %v584 = vpop.xlane.xlu0 %583
    %v585 = vsub.f32 %v577, %v581
    %v586 = vsub.f32 %v578, %v584
    %v587 = vmul.f32 %v585, 1.442695
    %v588 = vpow.pop %v587
    %v589 = vmul.f32 %v586, 1.442695
    %v590 = vpow.pop %v589
    %v591 = vsel %vm200, %v588, 0.0
    %592 = vadd.xlane.f32.xlu0 %v591
    %v593 = vpop.xlane.xlu0 %592
    %v594 = vsel %vm200, %v590, 0.0
    %595 = vadd.xlane.f32.xlu0 %v594
    %v596 = vpop.xlane.xlu0 %595
    %v597 = vrcp.pop %v593
    %v598 = vmul.f32 %v593, %v597
    %v599 = vsub.f32 1.0, %v598
    %v600 = vmul.f32 %v597, %v599
    %v601 = vadd.f32 %v597, %v600
    %vm602 = vweird.f32 %v593
    %vm603 = vweird.f32 %v597
    %vm604 = vmor %vm602, %vm603
    %v605 = vsel %vm604, %v597, %v601
    %v606 = vand.u32 2147483647, %v593
    %vm607 = vcmp.eq.f32.partialorder %v606, 8.507059e+37
    %v608 = vand.u32 %v593, 2147483648
    %v609 = vor.u32 1.1754944e-38, %v608
    %v610 = vsel %vm607, %v609, %v605
    %v611 = vmul.f32 %v588, %v610
    %v612 = vrcp.pop %v596
    %v613 = vmul.f32 %v596, %v612
    %v614 = vsub.f32 1.0, %v613
    %v615 = vmul.f32 %v612, %v614
    %v616 = vadd.f32 %v612, %v615
    %vm617 = vweird.f32 %v596
    %vm618 = vweird.f32 %v612
    %vm619 = vmor %vm617, %vm618
    %v620 = vsel %vm619, %v612, %v616
    %v621 = vand.u32 2147483647, %v596
    %vm622 = vcmp.eq.f32.partialorder %v621, 8.507059e+37
    %v623 = vand.u32 %v596, 2147483648
    %v624 = vor.u32 1.1754944e-38, %v623
    %v625 = vsel %vm622, %v624, %v620
    %v626 = vmul.f32 %v590, %v625
    %627 = vrot.lane.b32.xlu0 %v151, 40
    %v628 = vpop.permute.xlu0 %627
    %629 = vrot.lane.b32.xlu0 %v154, 40
    %v630 = vpop.permute.xlu0 %629
    %v634 = vsel %vm200, %v611, 0
    %v637 = vsel %vm200, %v626, 0
    %639 = vmatpush.msra.mxu0 0.0
    %640 = vmatpush.msra.mxu0 0.0
    %641 = vmatpush.msra.mxu0 0.0
    %642 = vmatpush.msra.mxu0 0.0
    %643 = vmatpush.msra.mxu0 0.0
    %644 = vmatpush.msra.mxu0 0.0
    %645 = vmatpush.msra.mxu0 0.0
    %646 = vmatpush.msra.mxu0 0.0
    %647 = vmatpush.msra.mxu0 0.0
    %648 = vmatpush.msra.mxu0 0.0
    %649 = vmatpush.msra.mxu0 0.0
    %650 = vmatpush.msra.mxu0 0.0
    %651 = vmatpush.msra.mxu0 0.0
    %652 = vmatpush.msra.mxu0 0.0
    %653 = vmatpush.msra.mxu0 %v630
    %654 = vmatpush.msra.mxu0 %v628
    %655 = vmatmul.f32.gmra.mxu0 %v634
    %v656 = vpop.f32.mrf.mxu0
    %v657 = vadd.f32 0.0, %v656
    %658 = vmatmul.f32.gmra.mxu0 %v637
    %v659 = vpop.f32.mrf.mxu0
    %v660 = vadd.f32 0.0, %v659
    %661 = vdwg.mxu0
    %664 = vrot.lane.b32.xlu0 %v405, 8
    %v665 = vpop.permute.xlu0 %664
    %666 = vrot.lane.b32.xlu0 %v408, 8
    %v667 = vpop.permute.xlu0 %666
    %672 = vrot.lane.b32.xlu0 %v531, 16
    %v673 = vpop.permute.xlu0 %672
    %674 = vrot.lane.b32.xlu0 %v534, 16
    %v675 = vpop.permute.xlu0 %674
    %680 = vrot.lane.b32.xlu0 %v657, 24
    %v681 = vpop.permute.xlu0 %680
    %682 = vrot.lane.b32.xlu0 %v660, 24
    %v683 = vpop.permute.xlu0 %682
    %v686 = vsel %vm164, %v279, %v665
    %v687 = vsel %vm164, %v282, %v667
    %v688 = vsel %vm200, %v686, %v673
    %v689 = vsel %vm200, %v687, %v675
    %vm690 = vcmask 195584
    %v691 = vsel %vm690, %v688, %v681
    %v692 = vsel %vm690, %v689, %v683
    %v693 = vld [vmem:[#allocation5] sm:$0xff]
    %v694 = vld [vmem:[#allocation5 + $0x8] sm:$0xff]
    %v695 = vld [vmem:[#allocation5 + $0x10] sm:$0xff]
    %v696 = vld [vmem:[#allocation5 + $0x18] sm:$0xff]
    %v697 = vld [vmem:[%s6] sm:$0x1]
    %v699 = vperm.slane %v697, 0
    %v702 = vsel %vm126, %v691, 0
    %v705 = vsel %vm126, %v692, 0
    %707 = vmatpush.msra.mxu0 0.0
    %708 = vmatpush.msra.mxu0 0.0
    %709 = vmatpush.msra.mxu0 0.0
    %710 = vmatpush.msra.mxu0 0.0
    %711 = vmatpush.msra.mxu0 0.0
    %712 = vmatpush.msra.mxu0 0.0
    %713 = vmatpush.msra.mxu0 0.0
    %714 = vmatpush.msra.mxu0 0.0
    %715 = vmatpush.msra.mxu0 0.0
    %716 = vmatpush.msra.mxu0 0.0
    %717 = vmatpush.msra.mxu0 0.0
    %718 = vmatpush.msra.mxu0 0.0
    %719 = vmatpush.msra.mxu0 %v696
    %720 = vmatpush.msra.mxu0 %v695
    %721 = vmatpush.msra.mxu0 %v694
    %722 = vmatpush.msra.mxu0 %v693
    %723 = vmatmul.f32.gmra.mxu0 %v702
    %v724 = vpop.f32.mrf.mxu0
    %v725 = vadd.f32 %v699, %v724
    %726 = vmatmul.f32.gmra.mxu0 %v705
    %v727 = vpop.f32.mrf.mxu0
    %v728 = vadd.f32 %v699, %v727
    %729 = vdwg.mxu0
    %v730 = vmax.f32 %v725, 0.0
    %v731 = vmax.f32 %v728, 0.0
    %v732 = vld [vmem:[%s7] sm:$0xff]
    %v733 = vld [vmem:[%s7 + $0x8] sm:$0xff]
    %v734 = vld [vmem:[%s7 + $0x10] sm:$0xff]
    %v735 = vld [vmem:[%s7 + $0x18] sm:$0xff]
    %v736 = vld [vmem:[%s7 + $0x20] sm:$0xff]
    %v737 = vld [vmem:[%s7 + $0x28] sm:$0xff]
    %v738 = vld [vmem:[%s7 + $0x30] sm:$0xff]
    %v739 = vld [vmem:[%s7 + $0x38] sm:$0xff]
    %v740 = vld [vmem:[%s7 + $0x40] sm:$0xff]
    %v741 = vld [vmem:[%s7 + $0x48] sm:$0xff]
    %v742 = vld [vmem:[%s7 + $0x50] sm:$0xff]
    %v743 = vld [vmem:[%s7 + $0x58] sm:$0xff]
    %v744 = vld [vmem:[%s7 + $0x60] sm:$0xff]
    %v745 = vld [vmem:[%s7 + $0x68] sm:$0xff]
    %v746 = vld [vmem:[%s7 + $0x70] sm:$0xff]
    %v747 = vld [vmem:[%s7 + $0x78] sm:$0xff]
    %v748 = vld [vmem:[%s8] sm:$0x1]
    %v750 = vperm.slane %v748, 0
    %752 = vmatpush.msra.mxu0 %v747
    %753 = vmatpush.msra.mxu0 %v746
    %754 = vmatpush.msra.mxu0 %v745
    %755 = vmatpush.msra.mxu0 %v744
    %756 = vmatpush.msra.mxu0 %v743
    %757 = vmatpush.msra.mxu0 %v742
    %758 = vmatpush.msra.mxu0 %v741
    %759 = vmatpush.msra.mxu0 %v740
    %760 = vmatpush.msra.mxu0 %v739
    %761 = vmatpush.msra.mxu0 %v738
    %762 = vmatpush.msra.mxu0 %v737
    %763 = vmatpush.msra.mxu0 %v736
    %764 = vmatpush.msra.mxu0 %v735
    %765 = vmatpush.msra.mxu0 %v734
    %766 = vmatpush.msra.mxu0 %v733
    %767 = vmatpush.msra.mxu0 %v732
    %768 = vmatmul.f32.gmra.mxu0 %v730
    %v769 = vpop.f32.mrf.mxu0
    %v770 = vadd.f32 %v750, %v769
    %771 = vmatmul.f32.gmra.mxu0 %v731
    %v772 = vpop.f32.mrf.mxu0
    %v773 = vadd.f32 %v750, %v772
    %774 = vdwg.mxu0
    %775 = vst [vmem:[#allocation7] sm:$0xff] %v770
    %776 = vst [vmem:[#allocation7 + $0x8] sm:$0xff] %v773
    // Predicated region
    $region46: #{tpu_custom_call.1} parent=1 // pred_check
      _
    $region47: #{tpu_custom_call.1} parent=1 // pred_check_branch
      %778 = sbr.rel (0) target = $region49
    $region48: #{tpu_custom_call.1} parent=1 // pred_region
      %780 = vsyncadd [#allocation4], 0
      %s781 = sshll.u32 [#allocation7], 4
      %s782 = int_to_ptr.vmem [resolvable:$true] %s781
      %s783 = sshll.u32 %s9, 4
      %s784 = int_to_ptr.hbm [resolvable:$true] %s783
      %789 = dma.vmem_to_hbm [thread:$0]  %s782, 256, %s784, [#allocation4], 128, 128, 8
    $region49: #{tpu_custom_call.1} parent=1 // pred_fallthru
      _
    // Predicated region
    $region50: #{tpu_custom_call.1} parent=1 // pred_check
      _
    $region51: #{tpu_custom_call.1} parent=1 // pred_check_branch
      %791 = sbr.rel (0) target = $region53
    $region52: #{tpu_custom_call.1} parent=1 // pred_region
      %793 = dma.done [#allocation4], 256
    $region53: #{tpu_custom_call.1} parent=1 // pred_fallthru
      _
    %794 = vsyncpa [#allocation3], 1
    %795 = vsyncpa [#allocation6], 1
    %796 = vsyncpa [#allocation4], 1

</llo_original>
